<compile_context>
chip_gen: v7x
topology: tpu7x:2x2x1
jax: 0.10.0
libtpu: 0.0.40
codegen_flags: <defaults>
</compile_context>

<pallas_src>
import jax
import jax.numpy as jnp
from jax.experimental import pallas as pl
from jax.experimental.pallas import tpu as pltpu

BATCH = 2
IN_DIM = 20
HID_DIM = 64
OUT_DIM = 2


def net_full_kernel(x_ref, w1_ref, b1_ref, w2_ref, b2_ref, out_ref):
    # x:  (N, 20)   w1: (20, 64)   b1: (1, 64)
    # w2: (64, 2)   b2: (1, 2)     out: (N, 2)
    x = x_ref[...]
    h = jnp.dot(x, w1_ref[...], preferred_element_type=jnp.float32) + b1_ref[...]
    h = jnp.maximum(h, 0.0)                                   # ReLU (VPU)
    out = jnp.dot(h, w2_ref[...], preferred_element_type=jnp.float32) + b2_ref[...]
    out_ref[...] = out
    # NOTE: out last-dim is 2 -> masked vst; negligible at this size.


def prep_params(p):
    """One-time parameter re-layout (kept out of the per-call forward path)."""
    return dict(
        w1t=jnp.transpose(p['fw1']),          # (20, 64)
        b1=p['fb1'].reshape(1, HID_DIM),      # (1, 64)
        w2t=jnp.transpose(p['fw2']),          # (64, 2)
        b2=p['fb2'].reshape(1, OUT_DIM),      # (1, 2)
    )


def net_full_forward(x, prepped):
    """x: (N, 20) float32.  Returns (N, 2) float32."""
    n = x.shape[0]
    vmem = pl.BlockSpec(memory_space=pltpu.MemorySpace.VMEM)
    return pl.pallas_call(
        net_full_kernel,
        out_shape=jax.ShapeDtypeStruct((n, OUT_DIM), jnp.float32),
        in_specs=[vmem] * 5,
        out_specs=vmem,
    )(x, prepped['w1t'], prepped['b1'], prepped['w2t'], prepped['b2'])


def init_params(key):
    """Deterministic synthetic parameters with nn.Linear's shapes/init scheme."""
    ks = jax.random.split(key, 4)

    def u(k, shape, fan_in):
        bound = 1.0 / (fan_in ** 0.5)
        return jax.random.uniform(k, shape, jnp.float32, -bound, bound)

    return dict(
        fw1=u(ks[0], (HID_DIM, IN_DIM), IN_DIM),   # fc1.weight (64, 20)
        fb1=u(ks[1], (HID_DIM,), IN_DIM),          # fc1.bias   (64,)
        fw2=u(ks[2], (OUT_DIM, HID_DIM), HID_DIM), # fc2.weight (2, 64)
        fb2=u(ks[3], (OUT_DIM,), HID_DIM),         # fc2.bias   (2,)
    )


def reference_forward(x, p):
    """Pure-JAX reference matching the PyTorch Net_Full.forward semantics."""
    h = jnp.maximum(x @ p['fw1'].T + p['fb1'], 0.0)
    return h @ p['fw2'].T + p['fb2']


if __name__ == "__main__":
    key = jax.random.PRNGKey(0)
    kx, kp = jax.random.split(key)
    x = jax.random.normal(kx, (BATCH, IN_DIM), jnp.float32)
    params = init_params(kp)
    prepped = prep_params(params)   # one-time weight re-layout (not per call)

    out = jax.jit(net_full_forward)(x, prepped)
    out = jax.block_until_ready(out)
    assert out.shape == (BATCH, OUT_DIM) and out.dtype == jnp.float32

    ref = reference_forward(x, params)
    if not jnp.allclose(out, ref, atol=1e-5, rtol=1e-5):
        raise AssertionError(f"mismatch: max abs err {jnp.max(jnp.abs(out - ref))}")

    print("KERNEL_OK")
</pallas_src>

<mosaic_0001>
module attributes {stable_mosaic.version = 11 : i64} {
  func.func @net_full_kernel(%arg0: memref<2x20xf32, #tpu.memory_space<vmem>>, %arg1: memref<20x64xf32, #tpu.memory_space<vmem>>, %arg2: memref<1x64xf32, #tpu.memory_space<vmem>>, %arg3: memref<64x2xf32, #tpu.memory_space<vmem>>, %arg4: memref<1x2xf32, #tpu.memory_space<vmem>>, %arg5: memref<2x2xf32, #tpu.memory_space<vmem>>) attributes {dimension_semantics = [], scalar_prefetch = 0 : i64, scratch_operands = 0 : i64, tpu.core_type = #tpu.core_type<tc>} {
    %c0 = arith.constant 0 : index
    %c0_0 = arith.constant 0 : index
    %0 = vector.load %arg0[%c0, %c0_0] : memref<2x20xf32, #tpu.memory_space<vmem>>, vector<2x20xf32>
    %c0_1 = arith.constant 0 : index
    %c0_2 = arith.constant 0 : index
    %1 = vector.load %arg1[%c0_1, %c0_2] : memref<20x64xf32, #tpu.memory_space<vmem>>, vector<20x64xf32>
    %cst = arith.constant dense<0.000000e+00> : vector<2x64xf32>
    %2 = tpu.matmul %0, %1, %cst {dimension_numbers = #tpu.dot_dimension_numbers<[1], [0], [0], [1], [0, 0, 1, 1], [], []>} : vector<2x20xf32>, vector<20x64xf32>, vector<2x64xf32> -> vector<2x64xf32>
    %c0_3 = arith.constant 0 : index
    %c0_4 = arith.constant 0 : index
    %3 = vector.load %arg2[%c0_3, %c0_4] : memref<1x64xf32, #tpu.memory_space<vmem>>, vector<1x64xf32>
    %4 = vector.broadcast %3 : vector<1x64xf32> to vector<2x64xf32>
    %5 = arith.addf %2, %4 : vector<2x64xf32>
    %cst_5 = arith.constant 0.000000e+00 : f32
    %6 = vector.broadcast %cst_5 : f32 to vector<2x64xf32>
    %7 = arith.maximumf %5, %6 : vector<2x64xf32>
    %c0_6 = arith.constant 0 : index
    %c0_7 = arith.constant 0 : index
    %8 = vector.load %arg3[%c0_6, %c0_7] : memref<64x2xf32, #tpu.memory_space<vmem>>, vector<64x2xf32>
    %cst_8 = arith.constant dense<0.000000e+00> : vector<2x2xf32>
    %9 = tpu.matmul %7, %8, %cst_8 {dimension_numbers = #tpu.dot_dimension_numbers<[1], [0], [0], [1], [0, 0, 1, 1], [], []>} : vector<2x64xf32>, vector<64x2xf32>, vector<2x2xf32> -> vector<2x2xf32>
    %c0_9 = arith.constant 0 : index
    %c0_10 = arith.constant 0 : index
    %10 = vector.load %arg4[%c0_9, %c0_10] : memref<1x2xf32, #tpu.memory_space<vmem>>, vector<1x2xf32>
    %11 = vector.broadcast %10 : vector<1x2xf32> to vector<2x2xf32>
    %12 = arith.addf %9, %11 : vector<2x2xf32>
    %c0_11 = arith.constant 0 : index
    %c0_12 = arith.constant 0 : index
    %13 = vector.load %arg5[%c0_11, %c0_12] : memref<2x2xf32, #tpu.memory_space<vmem>>, vector<2x2xf32>
    tpu.vector_store %arg5[%c0_11, %c0_12], %12 {strides = array<i32>} : memref<2x2xf32, #tpu.memory_space<vmem>>, vector<2x2xf32>,
    return
  }
}

</mosaic_0001>

<llo_original>
// kernel: net_full_forward.1
$region0: #{net_full_forward.1}
  #allocation0 [shape = 'u32[]', space=smem, size = 0x4, offset = 0x4, fixed_abs, tag = 'smem constant byte address 0x4 - core index']
  #allocation1 [shape = 'u32[144,128]{1,0:T(1,128)}', space=vmem, size = 0x12000, scoped, tag = 'internal scratch']
  %s0 = inlined_call_operand.vmem [shape: f32[2,20], index: 0, kind: input, shape index: {}]
  %s1 = inlined_call_operand.vmem [shape: f32[20,64], index: 1, kind: input, shape index: {}]
  %s2 = inlined_call_operand.vmem [shape: f32[1,64], index: 2, kind: input, shape index: {}]
  %s3 = inlined_call_operand.vmem [shape: f32[64,2], index: 3, kind: input, shape index: {}]
  %s4 = inlined_call_operand.vmem [shape: f32[1,2], index: 4, kind: input, shape index: {}]
  %s5 = inlined_call_operand.hbm [shape: f32[2,2], index: 5, kind: output, shape index: {}]
  %s6 = sld [smem:[#allocation0]]
  $region30: #{net_full_forward.1} parent=0
    _
  %s8 = ssub.s32 1, %s6
  %s9 = scalar_select 0, %s8, %s6
  $region1: #{net_full_forward.1} parent=0
    #allocation2 [shape = 'u8[1024]{0}', space=vmem, size = 0x400, scoped, tag = 'output window, operand 0, single buffered']
    #allocation3 [shape = 's32[1]{0}', space=sflag, size = 0x4, scoped, tag = 'scoped memory for net_full_forward.1']
    %10 = vsyncpa [#allocation3], 0
    // Predicated region
    $region2: #{net_full_forward.1} parent=1 // pred_check
      _
    $region3: #{net_full_forward.1} parent=1 // pred_check_branch
      %12 = sbr.rel (0) target = $region5
    $region4: #{net_full_forward.1} parent=1 // pred_region
      _
    $region5: #{net_full_forward.1} parent=1 // pred_fallthru
      _
    // Predicated region
    $region6: #{net_full_forward.1} parent=1 // pred_check
      _
    $region7: #{net_full_forward.1} parent=1 // pred_check_branch
      %14 = sbr.rel (0) target = $region9
    $region8: #{net_full_forward.1} parent=1 // pred_region
      _
    $region9: #{net_full_forward.1} parent=1 // pred_fallthru
      _
    // Predicated region
    $region10: #{net_full_forward.1} parent=1 // pred_check
      _
    $region11: #{net_full_forward.1} parent=1 // pred_check_branch
      %16 = sbr.rel (0) target = $region13
    $region12: #{net_full_forward.1} parent=1 // pred_region
      _
    $region13: #{net_full_forward.1} parent=1 // pred_fallthru
      _
    // Predicated region
    $region14: #{net_full_forward.1} parent=1 // pred_check
      _
    $region15: #{net_full_forward.1} parent=1 // pred_check_branch
      %18 = sbr.rel (0) target = $region17
    $region16: #{net_full_forward.1} parent=1 // pred_region
      _
    $region17: #{net_full_forward.1} parent=1 // pred_fallthru
      _
    // Predicated region
    $region18: #{net_full_forward.1} parent=1 // pred_check
      _
    $region19: #{net_full_forward.1} parent=1 // pred_check_branch
      %20 = sbr.rel (0) target = $region21
    $region20: #{net_full_forward.1} parent=1 // pred_region
      _
    $region21: #{net_full_forward.1} parent=1 // pred_fallthru
      _
    %v21 = vld [vmem:[%s0] sm:$0x3]
    %v22 = vld [vmem:[%s1] sm:$0xff]
    %v23 = vld [vmem:[%s1 + $0x8] sm:$0xff]
    %v24 = vld [vmem:[%s1 + $0x10] sm:$0xf]
    %v25 = vld [vmem:[%s2] sm:$0x1]
    %v27 = vlaneseq
    %v28 = vshrl.u32 %v27, 7
    %v29 = vsub.s32 0, %v28
    %v30 = vrot.slane %v25, %v29
    %vm32 = vcmask 162816
    %v34 = vsel %vm32, %v21, 0
    %vm36 = vcmask 1043456
    %v38 = vsel %vm36, %v24, 0
    %40 = vmatprep.subr.mxu0 0.0
    %41 = vmatpush1.msra.mxu0 %v22
    %42 = vmatprep.subr.mxu0 0.0
    %43 = vmatpush1.msra.mxu0 %v23
    %44 = vmatprep.subr.mxu0 0.0
    %45 = vmatpush1.msra.mxu0 %v38
    %46 = vmatprep.subr.mxu0 0.0
    %47 = vmatpush1.msra.mxu0 0.0
    %48 = vmatprep.subr.mxu0 0.0
    %49 = vmatpush1.msra.mxu0 0.0
    %50 = vmatprep.subr.mxu0 0.0
    %51 = vmatpush1.msra.mxu0 0.0
    %52 = vmatprep.subr.mxu0 0.0
    %53 = vmatpush1.msra.mxu0 0.0
    %54 = vmatprep.subr.mxu0 0.0
    %55 = vmatpush1.msra.mxu0 0.0
    %56 = vmatprep.subr.mxu0 0.0
    %57 = vmatpush1.msra.mxu0 0.0
    %58 = vmatprep.subr.mxu0 0.0
    %59 = vmatpush1.msra.mxu0 0.0
    %60 = vmatprep.subr.mxu0 0.0
    %61 = vmatpush1.msra.mxu0 0.0
    %62 = vmatprep.subr.mxu0 0.0
    %63 = vmatpush1.msra.mxu0 0.0
    %64 = vmatprep.subr.mxu0 0.0
    %65 = vmatpush1.msra.mxu0 0.0
    %66 = vmatprep.subr.mxu0 0.0
    %67 = vmatpush1.msra.mxu0 0.0
    %68 = vmatprep.subr.mxu0 0.0
    %69 = vmatpush1.msra.mxu0 0.0
    %70 = vmatprep.subr.mxu0 0.0
    %71 = vmatpush1.msra.mxu0 0.0
    %72 = vmatprep.subr.mxu0 0.0
    %73 = vmatpush1.msra.mxu0 0.0
    %74 = vmatprep.subr.mxu0 0.0
    %75 = vmatpush1.msra.mxu0 0.0
    %76 = vmatprep.subr.mxu0 0.0
    %77 = vmatpush1.msra.mxu0 0.0
    %78 = vmatprep.subr.mxu0 0.0
    %79 = vmatpush1.msra.mxu0 0.0
    %80 = vmatprep.subr.mxu0 0.0
    %81 = vmatpush1.msra.mxu0 0.0
    %82 = vmatprep.subr.mxu0 0.0
    %83 = vmatpush1.msra.mxu0 0.0
    %84 = vmatprep.subr.mxu0 0.0
    %85 = vmatpush1.msra.mxu0 0.0
    %86 = vmatprep.subr.mxu0 0.0
    %87 = vmatpush1.msra.mxu0 0.0
    %88 = vmatprep.subr.mxu0 0.0
    %89 = vmatpush1.msra.mxu0 0.0
    %90 = vmatprep.subr.mxu0 0.0
    %91 = vmatpush1.msra.mxu0 0.0
    %92 = vmatprep.subr.mxu0 0.0
    %93 = vmatpush1.msra.mxu0 0.0
    %94 = vmatprep.subr.mxu0 0.0
    %95 = vmatpush1.msra.mxu0 0.0
    %96 = vmatprep.subr.mxu0 0.0
    %97 = vmatpush1.msra.mxu0 0.0
    %98 = vmatprep.subr.mxu0 0.0
    %99 = vmatpush1.msra.mxu0 0.0
    %100 = vmatprep.subr.mxu0 0.0
    %101 = vmatpush1.msra.mxu0 0.0
    %102 = vmatprep.subr.mxu0 0.0
    %103 = vmatpush1.msra.mxu0 0.0
    %104 = vmatprep.mubr.f32.mxu0 0.0
    %105 = vmatmul.mubr.f32.gmra.mrb[0].mxu0 %v34
    %v106 = vpop.f32.mrb[0].mxu0
    %v107 = vadd.f32 %v30, %v106
    %v108 = vpop.f32.mrb[0].mxu0
    %109 = vdwg.mxu0
    %v110 = vmax.f32 %v107, 0.0
    %v111 = vld [vmem:[%s3] sm:$0xff]
    %v112 = vld [vmem:[%s3 + $0x8] sm:$0xff]
    %v113 = vld [vmem:[%s3 + $0x10] sm:$0xff]
    %v114 = vld [vmem:[%s3 + $0x18] sm:$0xff]
    %v115 = vld [vmem:[%s3 + $0x20] sm:$0xff]
    %v116 = vld [vmem:[%s3 + $0x28] sm:$0xff]
    %v117 = vld [vmem:[%s3 + $0x30] sm:$0xff]
    %v118 = vld [vmem:[%s3 + $0x38] sm:$0xff]
    %v119 = vld [vmem:[%s4] sm:$0x1]
    %v121 = vlaneseq
    %v122 = vshrl.u32 %v121, 7
    %v123 = vsub.s32 0, %v122
    %v124 = vrot.slane %v119, %v123
    %vm126 = vcmask 523264
    %v128 = vsel %vm126, %v110, 0
    %130 = vmatprep.subr.mxu0 0.0
    %131 = vmatpush1.msra.mxu0 %v111
    %132 = vmatprep.subr.mxu0 0.0
    %133 = vmatpush1.msra.mxu0 %v112
    %134 = vmatprep.subr.mxu0 0.0
    %135 = vmatpush1.msra.mxu0 %v113
    %136 = vmatprep.subr.mxu0 0.0
    %137 = vmatpush1.msra.mxu0 %v114
    %138 = vmatprep.subr.mxu0 0.0
    %139 = vmatpush1.msra.mxu0 %v115
    %140 = vmatprep.subr.mxu0 0.0
    %141 = vmatpush1.msra.mxu0 %v116
    %142 = vmatprep.subr.mxu0 0.0
    %143 = vmatpush1.msra.mxu0 %v117
    %144 = vmatprep.subr.mxu0 0.0
    %145 = vmatpush1.msra.mxu0 %v118
    %146 = vmatprep.subr.mxu0 0.0
    %147 = vmatpush1.msra.mxu0 0.0
    %148 = vmatprep.subr.mxu0 0.0
    %149 = vmatpush1.msra.mxu0 0.0
    %150 = vmatprep.subr.mxu0 0.0
    %151 = vmatpush1.msra.mxu0 0.0
    %152 = vmatprep.subr.mxu0 0.0
    %153 = vmatpush1.msra.mxu0 0.0
    %154 = vmatprep.subr.mxu0 0.0
    %155 = vmatpush1.msra.mxu0 0.0
    %156 = vmatprep.subr.mxu0 0.0
    %157 = vmatpush1.msra.mxu0 0.0
    %158 = vmatprep.subr.mxu0 0.0
    %159 = vmatpush1.msra.mxu0 0.0
    %160 = vmatprep.subr.mxu0 0.0
    %161 = vmatpush1.msra.mxu0 0.0
    %162 = vmatprep.subr.mxu0 0.0
    %163 = vmatpush1.msra.mxu0 0.0
    %164 = vmatprep.subr.mxu0 0.0
    %165 = vmatpush1.msra.mxu0 0.0
    %166 = vmatprep.subr.mxu0 0.0
    %167 = vmatpush1.msra.mxu0 0.0
    %168 = vmatprep.subr.mxu0 0.0
    %169 = vmatpush1.msra.mxu0 0.0
    %170 = vmatprep.subr.mxu0 0.0
    %171 = vmatpush1.msra.mxu0 0.0
    %172 = vmatprep.subr.mxu0 0.0
    %173 = vmatpush1.msra.mxu0 0.0
    %174 = vmatprep.subr.mxu0 0.0
    %175 = vmatpush1.msra.mxu0 0.0
    %176 = vmatprep.subr.mxu0 0.0
    %177 = vmatpush1.msra.mxu0 0.0
    %178 = vmatprep.subr.mxu0 0.0
    %179 = vmatpush1.msra.mxu0 0.0
    %180 = vmatprep.subr.mxu0 0.0
    %181 = vmatpush1.msra.mxu0 0.0
    %182 = vmatprep.subr.mxu0 0.0
    %183 = vmatpush1.msra.mxu0 0.0
    %184 = vmatprep.subr.mxu0 0.0
    %185 = vmatpush1.msra.mxu0 0.0
    %186 = vmatprep.subr.mxu0 0.0
    %187 = vmatpush1.msra.mxu0 0.0
    %188 = vmatprep.subr.mxu0 0.0
    %189 = vmatpush1.msra.mxu0 0.0
    %190 = vmatprep.subr.mxu0 0.0
    %191 = vmatpush1.msra.mxu0 0.0
    %192 = vmatprep.subr.mxu0 0.0
    %193 = vmatpush1.msra.mxu0 0.0
    %194 = vmatprep.mubr.f32.mxu0 0.0
    %195 = vmatmul.mubr.f32.gmra.mrb[0].mxu0 %v128
    %v196 = vpop.f32.mrb[0].mxu0
    %v197 = vadd.f32 %v124, %v196
    %v198 = vpop.f32.mrb[0].mxu0
    %199 = vdwg.mxu0
    %vm200 = vcmask 9216
    %201 = vst.msk [vmem:[#allocation2] sm:$0x3] %vm200, %v197
    // Predicated region
    $region22: #{net_full_forward.1} parent=1 // pred_check
      _
    $region23: #{net_full_forward.1} parent=1 // pred_check_branch
      %203 = sbr.rel (0) target = $region25
    $region24: #{net_full_forward.1} parent=1 // pred_region
      %s205 = ssub.s32 32, 32
      %206 = vsyncadd [#allocation3], %s205
      %s208 = sshll.u32 [#allocation2], 4
      %s209 = int_to_ptr.vmem [resolvable:$true] %s208
      %211 = dma.vmem_to_hbm [thread:$0]  %s209, 32, %s5, [#allocation3]
    $region25: #{net_full_forward.1} parent=1 // pred_fallthru
      _
    // Predicated region
    $region26: #{net_full_forward.1} parent=1 // pred_check
      _
    $region27: #{net_full_forward.1} parent=1 // pred_check_branch
      %213 = sbr.rel (0) target = $region29
    $region28: #{net_full_forward.1} parent=1 // pred_region
      %214 = dma.done [#allocation3], 32
    $region29: #{net_full_forward.1} parent=1 // pred_fallthru
      _
    %215 = vsyncpa [#allocation3], 1

</llo_original>
